<compile_context>
chip_gen: v7x
topology: tpu7x:2x2x1
jax: 0.10.0
libtpu: 0.0.40
codegen_flags: <defaults>
</compile_context>

<pallas_src>
import functools

import jax
import jax.numpy as jnp
import numpy as np
from jax import lax
from jax.experimental import pallas as pl
from jax.experimental.pallas import tpu as pltpu


def _sigmoid(x):
    # Exact form kept for the 1e-4 correctness check (exp runs on the EUP).
    return 1.0 / (1.0 + jnp.exp(-x))


def _roll_lanes(x, shift):
    """Roll along the last (lane) axis; skip shift-0 rolls entirely."""
    n = x.shape[-1]
    shift = shift % n
    if shift == 0:
        return x
    return pltpu.roll(x, shift, 1)


def cbam_kernel(x_ref, w1t_ref, w2t_ref, wmask_ref, hmask_ref, wsp_ref, o_ref,
                *, H, W, HWp, K, P):
    # x_ref:     (NB, C, HWp) VMEM, lane-dense (HWp = H*W padded to mult. of 128)
    # w1t_ref:   (C, Cr)      VMEM  (fc1 weight, pre-transposed)
    # w2t_ref:   (Cr, C)      VMEM  (fc2 weight, pre-transposed)
    # wmask_ref: (K, 1, HWp)  VMEM  per-dw W-boundary masks
    # hmask_ref: (K, 1, HWp)  VMEM  per-dh H-boundary masks
    # wsp_ref:   (K*NB, 2*K*NB) VMEM  spatial conv weights, block-diag over batch
    HW = H * W
    x = x_ref[...]                                   # (NB, C, HWp) native dtype
    NB = x.shape[0]

    # ---------------- channel attention ----------------
    # TODO(synk): for bf16 activations keep the big slab bf16-resident and only
    # upcast the pooled (NB,C)/(NB,HWp) tensors (halves HBM/VMEM on v6e/v7x).
    xf = x.astype(jnp.float32)
    avg = jnp.sum(xf, axis=2) * (1.0 / HW)           # (NB, C); pad lanes are 0
    if HWp != HW:
        lane = lax.broadcasted_iota(jnp.int32, (1, 1, HWp), 2)
        mx = jnp.max(jnp.where(lane < HW, xf, -jnp.inf), axis=2)
    else:
        mx = jnp.max(xf, axis=2)                     # (NB, C)
    pooled = jnp.concatenate([avg, mx], axis=0)      # (2*NB, C)

    h = jnp.maximum(
        jnp.dot(pooled, w1t_ref[...], preferred_element_type=jnp.float32), 0.0)
    mlp = jnp.dot(h, w2t_ref[...], preferred_element_type=jnp.float32)  # (2NB, C)
    ca = _sigmoid(mlp[:NB] + mlp[NB:])               # (NB, C)

    # x*ca is only needed (a) for the channel-wise mean/max below and (b) at the
    # final store.  Stage it through o_ref so the f32 copy is not live across
    # the spatial-attention phase (peak-VMEM item from the review).
    x1 = xf * ca[:, :, None]                         # transient f32 (NB, C, HWp)
    o_ref[...] = x1.astype(o_ref.dtype)
    avg_c = jnp.mean(x1, axis=1)                     # (NB, HWp)
    max_c = jnp.max(x1, axis=1)                      # (NB, HWp)

    # ---------------- spatial attention (factored 7x7 conv) ----------------
    # Stack avg/max along sublanes: one roll + one wmask multiply per dw.
    cat = jnp.concatenate([avg_c, max_c], axis=0)    # (2*NB, HWp)
    rolled = []
    for dwi in range(K):
        dw = dwi - P
        rolled.append(_roll_lanes(cat, -dw) * wmask_ref[dwi])
    X = jnp.concatenate(rolled, axis=0)              # (2*K*NB, HWp)

    # Contraction over (in-channel, dw) on the MXU (idle otherwise).
    # Row order of S: dh*NB + n.
    S = jnp.dot(wsp_ref[...], X, preferred_element_type=jnp.float32)  # (K*NB, HWp)

    acc = jnp.zeros((NB, HWp), jnp.float32)
    for dhi in range(K):
        dh = dhi - P
        s = S[dhi * NB:(dhi + 1) * NB, :]            # (NB, HWp)
        acc = acc + hmask_ref[dhi] * _roll_lanes(s, -dh * W)
    sa = _sigmoid(acc)                               # (NB, HWp)

    # Re-read the staged x*ca and apply spatial attention (full-width stores).
    o_ref[...] = (o_ref[...].astype(jnp.float32) * sa[:, None, :]).astype(o_ref.dtype)


def cbam_pallas(x, w1, w2, wsp, *, batch_block=None):
    N, C, H, W = x.shape
    HW = H * W
    HWp = ((HW + 127) // 128) * 128                  # lane-dense padded length
    K = wsp.shape[-1]
    P = K // 2

    # ---- batch tile selection: >=2..4 grid steps (pipelining, v7x dual-TC),
    #      then shrink until the working set fits the default scoped VMEM. ----
    def vmem_need(nb):
        blk = nb * C * HWp * x.dtype.itemsize        # one (NB,C,HWp) block
        f32blk = nb * C * HWp * 4
        # 2x in + 2x out (double buffering) + transient f32 x1/store temp + margin
        return 4 * blk + 2 * f32blk + (2 << 20)

    if batch_block is None:
        nb = max(1, N // 4)
        while N % nb:
            nb -= 1
        while nb > 1 and vmem_need(nb) > (14 << 20):
            nb -= 1
            while N % nb:
                nb -= 1
        NB = nb
    else:
        NB = int(batch_block)
    assert N % NB == 0

    vmem_limit = None
    if vmem_need(NB) > (14 << 20):
        # TODO(synk): for very large C*HW even NB=1 may exceed v7x's 64 MiB VMEM;
        # split the block over H (keeping the lane axis a multiple of 128) there.
        vmem_limit = int(min(max(vmem_need(NB) * 5 // 4, 32 << 20), 48 << 20))

    # ---- wrapper-side layout plumbing (kept out of the kernel hot path) ----
    x3 = x.reshape(N, C, HW)
    if HWp != HW:
        x3 = jnp.pad(x3, ((0, 0), (0, 0), (0, HWp - HW)))
    w1t = jnp.asarray(w1, jnp.float32).T             # (C, Cr)
    w2t = jnp.asarray(w2, jnp.float32).T             # (Cr, C)

    # Spatial-conv weights as a block-diagonal (over batch) matmul operand:
    #   wsp_big[dh*NB + n, dw*(2*NB) + ic*NB + m] = wsp[ic, dh, dw] * (n == m)
    wsp_m = jnp.asarray(wsp, jnp.float32)            # (2, K, K) [ic, kh, kw]
    eye = jnp.eye(NB, dtype=jnp.float32)
    wsp_big = jnp.einsum('ihw,nm->hnwim', wsp_m, eye).reshape(K * NB, 2 * K * NB)

    # Separable zero-padding masks in flattened (padded) H*W coordinates.
    cols = np.arange(HWp) % W
    rows = np.arange(HWp) // W
    wmask = np.stack([((cols + d >= 0) & (cols + d < W)).astype(np.float32)
                      for d in range(-P, P + 1)])[:, None, :]    # (K, 1, HWp)
    hmask = np.stack([((rows + d >= 0) & (rows + d < H)).astype(np.float32)
                      for d in range(-P, P + 1)])[:, None, :]    # (K, 1, HWp)
    wmask = jnp.asarray(wmask)
    hmask = jnp.asarray(hmask)

    kernel = functools.partial(cbam_kernel, H=H, W=W, HWp=HWp, K=K, P=P)

    out3 = pl.pallas_call(
        kernel,
        out_shape=jax.ShapeDtypeStruct((N, C, HWp), x.dtype),
        grid=(N // NB,),
        in_specs=[
            pl.BlockSpec((NB, C, HWp), lambda n: (n, 0, 0)),
            pl.BlockSpec(memory_space=pltpu.MemorySpace.VMEM),
            pl.BlockSpec(memory_space=pltpu.MemorySpace.VMEM),
            pl.BlockSpec(memory_space=pltpu.MemorySpace.VMEM),
            pl.BlockSpec(memory_space=pltpu.MemorySpace.VMEM),
            pl.BlockSpec(memory_space=pltpu.MemorySpace.VMEM),
        ],
        out_specs=pl.BlockSpec((NB, C, HWp), lambda n: (n, 0, 0)),
        compiler_params=pltpu.CompilerParams(
            dimension_semantics=("parallel",),       # batch-parallel (v7x: 2 TCs)
            vmem_limit_bytes=vmem_limit),
    )(x3, w1t, w2t, wmask, hmask, wsp_big)

    if HWp != HW:
        out3 = out3[:, :, :HW]
    return out3.reshape(N, C, H, W)


def cbam_reference(x, w1, w2, wsp):
    """Pure-JAX reference mirroring the PyTorch forward (NCHW)."""
    avg = jnp.mean(x, axis=(2, 3), keepdims=True)
    mx = jnp.max(x, axis=(2, 3), keepdims=True)

    def mlp(p):  # p: (N, C, 1, 1)
        h = jax.nn.relu(jnp.einsum('rc,nchw->nrhw', w1, p))
        return jnp.einsum('cr,nrhw->nchw', w2, h)

    ca = jax.nn.sigmoid(mlp(avg) + mlp(mx))
    x1 = x * ca

    avg_c = jnp.mean(x1, axis=1, keepdims=True)
    max_c = jnp.max(x1, axis=1, keepdims=True)
    sp_in = jnp.concatenate([avg_c, max_c], axis=1)              # (N, 2, H, W)
    pad = wsp.shape[-1] // 2
    conv = lax.conv_general_dilated(
        sp_in, wsp[None],                                        # (1, 2, K, K)
        window_strides=(1, 1), padding=((pad, pad), (pad, pad)),
        dimension_numbers=('NCHW', 'OIHW', 'NCHW'))
    sa = jax.nn.sigmoid(conv)
    return x1 * sa


if __name__ == "__main__":
    # cbam_block(channel=16, ratio=8, kernel_size=7)
    N, C, H, W = 4, 16, 16, 16
    ratio = 8
    Cr = C // ratio

    key = jax.random.PRNGKey(0)
    k1, k2, k3, k4 = jax.random.split(key, 4)
    x = jax.random.normal(k1, (N, C, H, W), jnp.float32)
    w1 = 0.5 * jax.random.normal(k2, (Cr, C), jnp.float32)       # fc1 (1x1 conv)
    w2 = 0.5 * jax.random.normal(k3, (C, Cr), jnp.float32)       # fc2 (1x1 conv)
    wsp = 0.2 * jax.random.normal(k4, (2, 7, 7), jnp.float32)    # spatial 7x7 conv

    ref = cbam_reference(x, w1, w2, wsp)

    # Default tiling: NB = max(1, N//4) = 1 -> grid of 4 pipelined steps.
    out = jax.block_until_ready(cbam_pallas(x, w1, w2, wsp))
    np.testing.assert_allclose(np.asarray(out), np.asarray(ref),
                               atol=1e-4, rtol=1e-4)

    # NB > 1 path (block-diagonal spatial weights, grid of 2 steps).
    out2 = jax.block_until_ready(cbam_pallas(x, w1, w2, wsp, batch_block=2))
    np.testing.assert_allclose(np.asarray(out2), np.asarray(ref),
                               atol=1e-4, rtol=1e-4)

    # HW not a multiple of 128 (10x10 = 100 -> padded to 128 lanes).
    xs = jax.random.normal(k1, (2, C, 10, 10), jnp.float32)
    refs = cbam_reference(xs, w1, w2, wsp)
    outs = jax.block_until_ready(cbam_pallas(xs, w1, w2, wsp))
    np.testing.assert_allclose(np.asarray(outs), np.asarray(refs),
                               atol=1e-4, rtol=1e-4)

    print("KERNEL_OK")
</pallas_src>

<mosaic_0001>
module attributes {stable_mosaic.version = 11 : i64} {
  func.func @cbam_kernel(%arg0: i32, %arg1: memref<1x16x256xf32, #tpu.memory_space<vmem>>, %arg2: memref<16x2xf32, #tpu.memory_space<vmem>>, %arg3: memref<2x16xf32, #tpu.memory_space<vmem>>, %arg4: memref<7x1x256xf32, #tpu.memory_space<vmem>>, %arg5: memref<7x1x256xf32, #tpu.memory_space<vmem>>, %arg6: memref<7x14xf32, #tpu.memory_space<vmem>>, %arg7: memref<1x16x256xf32, #tpu.memory_space<vmem>>) attributes {dimension_semantics = [#tpu.dimension_semantics<parallel>], iteration_bounds = array<i64: 4>, scalar_prefetch = 0 : i64, scratch_operands = 0 : i64, tpu.core_type = #tpu.core_type<tc>, window_params = [{transform_indices = @transform_0, window_bounds = array<i64: 1, 16, 256>}, {pipeline_mode = #tpu.pipeline_mode<synchronous>, transform_indices = @transform_1, window_bounds = array<i64: 16, 2>}, {pipeline_mode = #tpu.pipeline_mode<synchronous>, transform_indices = @transform_2, window_bounds = array<i64: 2, 16>}, {pipeline_mode = #tpu.pipeline_mode<synchronous>, transform_indices = @transform_3, window_bounds = array<i64: 7, 1, 256>}, {pipeline_mode = #tpu.pipeline_mode<synchronous>, transform_indices = @transform_4, window_bounds = array<i64: 7, 1, 256>}, {pipeline_mode = #tpu.pipeline_mode<synchronous>, transform_indices = @transform_5, window_bounds = array<i64: 7, 14>}, {transform_indices = @transform_6, window_bounds = array<i64: 1, 16, 256>}]} {
    %c0 = arith.constant 0 : index
    %c0_0 = arith.constant 0 : index
    %c0_1 = arith.constant 0 : index
    %0 = vector.load %arg1[%c0, %c0_0, %c0_1] : memref<1x16x256xf32, #tpu.memory_space<vmem>>, vector<1x16x256xf32>
    %cst = arith.constant dense<0.000000e+00> : vector<1x16xf32>
    %1 = vector.multi_reduction <add>, %0, %cst [2] : vector<1x16x256xf32> to vector<1x16xf32>
    %cst_2 = arith.constant 3.906250e-03 : f32
    %2 = vector.broadcast %cst_2 : f32 to vector<1x16xf32>
    %3 = arith.mulf %1, %2 : vector<1x16xf32>
    %cst_3 = arith.constant dense<0xFF800000> : vector<1x16xf32>
    %4 = vector.multi_reduction <maximumf>, %0, %cst_3 [2] : vector<1x16x256xf32> to vector<1x16xf32>
    %5 = tpu.concatenate %3, %4 in 0 : vector<1x16xf32>, vector<1x16xf32> -> vector<2x16xf32>
    %c0_4 = arith.constant 0 : index
    %c0_5 = arith.constant 0 : index
    %6 = vector.load %arg2[%c0_4, %c0_5] : memref<16x2xf32, #tpu.memory_space<vmem>>, vector<16x2xf32>
    %cst_6 = arith.constant dense<0.000000e+00> : vector<2x2xf32>
    %7 = tpu.matmul %5, %6, %cst_6 {dimension_numbers = #tpu.dot_dimension_numbers<[1], [0], [0], [1], [0, 0, 1, 1], [], []>} : vector<2x16xf32>, vector<16x2xf32>, vector<2x2xf32> -> vector<2x2xf32>
    %cst_7 = arith.constant 0.000000e+00 : f32
    %8 = vector.broadcast %cst_7 : f32 to vector<2x2xf32>
    %9 = arith.maximumf %7, %8 : vector<2x2xf32>
    %c0_8 = arith.constant 0 : index
    %c0_9 = arith.constant 0 : index
    %10 = vector.load %arg3[%c0_8, %c0_9] : memref<2x16xf32, #tpu.memory_space<vmem>>, vector<2x16xf32>
    %cst_10 = arith.constant dense<0.000000e+00> : vector<2x16xf32>
    %11 = tpu.matmul %9, %10, %cst_10 {dimension_numbers = #tpu.dot_dimension_numbers<[1], [0], [0], [1], [0, 0, 1, 1], [], []>} : vector<2x2xf32>, vector<2x16xf32>, vector<2x16xf32> -> vector<2x16xf32>
    %12 = vector.extract_strided_slice %11 {offsets = [0, 0], sizes = [1, 16], strides = [1, 1]} : vector<2x16xf32> to vector<1x16xf32>
    %13 = vector.extract_strided_slice %11 {offsets = [1, 0], sizes = [1, 16], strides = [1, 1]} : vector<2x16xf32> to vector<1x16xf32>
    %14 = arith.addf %12, %13 : vector<1x16xf32>
    %cst_11 = arith.constant 0.000000e+00 : f32
    %15 = vector.broadcast %cst_11 : f32 to vector<1x16xf32>
    %16 = arith.subf %15, %14 : vector<1x16xf32>
    %17 = math.exp %16 : vector<1x16xf32>
    %cst_12 = arith.constant 1.000000e+00 : f32
    %18 = vector.broadcast %cst_12 : f32 to vector<1x16xf32>
    %19 = arith.addf %18, %17 : vector<1x16xf32>
    %cst_13 = arith.constant 1.000000e+00 : f32
    %20 = vector.broadcast %cst_13 : f32 to vector<1x16xf32>
    %21 = arith.divf %20, %19 : vector<1x16xf32>
    %22 = vector.shape_cast %21 : vector<1x16xf32> to vector<1x16x1xf32>
    %23 = vector.broadcast %22 : vector<1x16x1xf32> to vector<1x16x256xf32>
    %24 = arith.mulf %0, %23 : vector<1x16x256xf32>
    %c0_14 = arith.constant 0 : index
    %c0_15 = arith.constant 0 : index
    %c0_16 = arith.constant 0 : index
    %25 = vector.load %arg7[%c0_14, %c0_15, %c0_16] : memref<1x16x256xf32, #tpu.memory_space<vmem>>, vector<1x16x256xf32>
    tpu.vector_store %arg7[%c0_14, %c0_15, %c0_16], %24 {strides = array<i32>} : memref<1x16x256xf32, #tpu.memory_space<vmem>>, vector<1x16x256xf32>,
    %cst_17 = arith.constant dense<0.000000e+00> : vector<1x256xf32>
    %26 = vector.multi_reduction <add>, %24, %cst_17 [1] : vector<1x16x256xf32> to vector<1x256xf32>
    %cst_18 = arith.constant 1.600000e+01 : f32
    %27 = vector.broadcast %cst_18 : f32 to vector<1x256xf32>
    %28 = arith.divf %26, %27 : vector<1x256xf32>
    %cst_19 = arith.constant dense<0xFF800000> : vector<1x256xf32>
    %29 = vector.multi_reduction <maximumf>, %24, %cst_19 [1] : vector<1x16x256xf32> to vector<1x256xf32>
    %30 = tpu.concatenate %28, %29 in 0 : vector<1x256xf32>, vector<1x256xf32> -> vector<2x256xf32>
    %c3_i32 = arith.constant 3 : i32
    %31 = tpu.dynamic_rotate %30 by %c3_i32 dim 1 : vector<2x256xf32>, i32 -> vector<2x256xf32>
    %c0_20 = arith.constant 0 : index
    %c0_21 = arith.constant 0 : index
    %c0_22 = arith.constant 0 : index
    %32 = vector.load %arg4[%c0_20, %c0_21, %c0_22] : memref<7x1x256xf32, #tpu.memory_space<vmem>>, vector<1x1x256xf32>
    %33 = vector.shape_cast %32 : vector<1x1x256xf32> to vector<1x256xf32>
    %34 = vector.broadcast %33 : vector<1x256xf32> to vector<2x256xf32>
    %35 = arith.mulf %31, %34 : vector<2x256xf32>
    %c2_i32 = arith.constant 2 : i32
    %36 = tpu.dynamic_rotate %30 by %c2_i32 dim 1 : vector<2x256xf32>, i32 -> vector<2x256xf32>
    %c1 = arith.constant 1 : index
    %c0_23 = arith.constant 0 : index
    %c0_24 = arith.constant 0 : index
    %37 = vector.load %arg4[%c1, %c0_23, %c0_24] : memref<7x1x256xf32, #tpu.memory_space<vmem>>, vector<1x1x256xf32>
    %38 = vector.shape_cast %37 : vector<1x1x256xf32> to vector<1x256xf32>
    %39 = vector.broadcast %38 : vector<1x256xf32> to vector<2x256xf32>
    %40 = arith.mulf %36, %39 : vector<2x256xf32>
    %c1_i32 = arith.constant 1 : i32
    %41 = tpu.dynamic_rotate %30 by %c1_i32 dim 1 : vector<2x256xf32>, i32 -> vector<2x256xf32>
    %c2 = arith.constant 2 : index
    %c0_25 = arith.constant 0 : index
    %c0_26 = arith.constant 0 : index
    %42 = vector.load %arg4[%c2, %c0_25, %c0_26] : memref<7x1x256xf32, #tpu.memory_space<vmem>>, vector<1x1x256xf32>
    %43 = vector.shape_cast %42 : vector<1x1x256xf32> to vector<1x256xf32>
    %44 = vector.broadcast %43 : vector<1x256xf32> to vector<2x256xf32>
    %45 = arith.mulf %41, %44 : vector<2x256xf32>
    %c3 = arith.constant 3 : index
    %c0_27 = arith.constant 0 : index
    %c0_28 = arith.constant 0 : index
    %46 = vector.load %arg4[%c3, %c0_27, %c0_28] : memref<7x1x256xf32, #tpu.memory_space<vmem>>, vector<1x1x256xf32>
    %47 = vector.shape_cast %46 : vector<1x1x256xf32> to vector<1x256xf32>
    %48 = vector.broadcast %47 : vector<1x256xf32> to vector<2x256xf32>
    %49 = arith.mulf %30, %48 : vector<2x256xf32>
    %c255_i32 = arith.constant 255 : i32
    %50 = tpu.dynamic_rotate %30 by %c255_i32 dim 1 : vector<2x256xf32>, i32 -> vector<2x256xf32>
    %c4 = arith.constant 4 : index
    %c0_29 = arith.constant 0 : index
    %c0_30 = arith.constant 0 : index
    %51 = vector.load %arg4[%c4, %c0_29, %c0_30] : memref<7x1x256xf32, #tpu.memory_space<vmem>>, vector<1x1x256xf32>
    %52 = vector.shape_cast %51 : vector<1x1x256xf32> to vector<1x256xf32>
    %53 = vector.broadcast %52 : vector<1x256xf32> to vector<2x256xf32>
    %54 = arith.mulf %50, %53 : vector<2x256xf32>
    %c254_i32 = arith.constant 254 : i32
    %55 = tpu.dynamic_rotate %30 by %c254_i32 dim 1 : vector<2x256xf32>, i32 -> vector<2x256xf32>
    %c5 = arith.constant 5 : index
    %c0_31 = arith.constant 0 : index
    %c0_32 = arith.constant 0 : index
    %56 = vector.load %arg4[%c5, %c0_31, %c0_32] : memref<7x1x256xf32, #tpu.memory_space<vmem>>, vector<1x1x256xf32>
    %57 = vector.shape_cast %56 : vector<1x1x256xf32> to vector<1x256xf32>
    %58 = vector.broadcast %57 : vector<1x256xf32> to vector<2x256xf32>
    %59 = arith.mulf %55, %58 : vector<2x256xf32>
    %c253_i32 = arith.constant 253 : i32
    %60 = tpu.dynamic_rotate %30 by %c253_i32 dim 1 : vector<2x256xf32>, i32 -> vector<2x256xf32>
    %c6 = arith.constant 6 : index
    %c0_33 = arith.constant 0 : index
    %c0_34 = arith.constant 0 : index
    %61 = vector.load %arg4[%c6, %c0_33, %c0_34] : memref<7x1x256xf32, #tpu.memory_space<vmem>>, vector<1x1x256xf32>
    %62 = vector.shape_cast %61 : vector<1x1x256xf32> to vector<1x256xf32>
    %63 = vector.broadcast %62 : vector<1x256xf32> to vector<2x256xf32>
    %64 = arith.mulf %60, %63 : vector<2x256xf32>
    %65 = tpu.concatenate %35, %40, %45, %49, %54, %59, %64 in 0 : vector<2x256xf32>, vector<2x256xf32>, vector<2x256xf32>, vector<2x256xf32>, vector<2x256xf32>, vector<2x256xf32>, vector<2x256xf32> -> vector<14x256xf32>
    %c0_35 = arith.constant 0 : index
    %c0_36 = arith.constant 0 : index
    %66 = vector.load %arg6[%c0_35, %c0_36] : memref<7x14xf32, #tpu.memory_space<vmem>>, vector<7x14xf32>
    %cst_37 = arith.constant dense<0.000000e+00> : vector<7x256xf32>
    %67 = tpu.matmul %66, %65, %cst_37 {dimension_numbers = #tpu.dot_dimension_numbers<[1], [0], [0], [1], [0, 0, 1, 1], [], []>} : vector<7x14xf32>, vector<14x256xf32>, vector<7x256xf32> -> vector<7x256xf32>
    %cst_38 = arith.constant 0.000000e+00 : f32
    %68 = vector.broadcast %cst_38 : f32 to vector<1x256xf32>
    %69 = vector.extract_strided_slice %67 {offsets = [0, 0], sizes = [1, 256], strides = [1, 1]} : vector<7x256xf32> to vector<1x256xf32>
    %c0_39 = arith.constant 0 : index
    %c0_40 = arith.constant 0 : index
    %c0_41 = arith.constant 0 : index
    %70 = vector.load %arg5[%c0_39, %c0_40, %c0_41] : memref<7x1x256xf32, #tpu.memory_space<vmem>>, vector<1x1x256xf32>
    %71 = vector.shape_cast %70 : vector<1x1x256xf32> to vector<1x256xf32>
    %c48_i32 = arith.constant 48 : i32
    %72 = tpu.dynamic_rotate %69 by %c48_i32 dim 1 : vector<1x256xf32>, i32 -> vector<1x256xf32>
    %73 = arith.mulf %71, %72 : vector<1x256xf32>
    %74 = arith.addf %68, %73 : vector<1x256xf32>
    %75 = vector.extract_strided_slice %67 {offsets = [1, 0], sizes = [1, 256], strides = [1, 1]} : vector<7x256xf32> to vector<1x256xf32>
    %c1_42 = arith.constant 1 : index
    %c0_43 = arith.constant 0 : index
    %c0_44 = arith.constant 0 : index
    %76 = vector.load %arg5[%c1_42, %c0_43, %c0_44] : memref<7x1x256xf32, #tpu.memory_space<vmem>>, vector<1x1x256xf32>
    %77 = vector.shape_cast %76 : vector<1x1x256xf32> to vector<1x256xf32>
    %c32_i32 = arith.constant 32 : i32
    %78 = tpu.dynamic_rotate %75 by %c32_i32 dim 1 : vector<1x256xf32>, i32 -> vector<1x256xf32>
    %79 = arith.mulf %77, %78 : vector<1x256xf32>
    %80 = arith.addf %74, %79 : vector<1x256xf32>
    %81 = vector.extract_strided_slice %67 {offsets = [2, 0], sizes = [1, 256], strides = [1, 1]} : vector<7x256xf32> to vector<1x256xf32>
    %c2_45 = arith.constant 2 : index
    %c0_46 = arith.constant 0 : index
    %c0_47 = arith.constant 0 : index
    %82 = vector.load %arg5[%c2_45, %c0_46, %c0_47] : memref<7x1x256xf32, #tpu.memory_space<vmem>>, vector<1x1x256xf32>
    %83 = vector.shape_cast %82 : vector<1x1x256xf32> to vector<1x256xf32>
    %c16_i32 = arith.constant 16 : i32
    %84 = tpu.dynamic_rotate %81 by %c16_i32 dim 1 : vector<1x256xf32>, i32 -> vector<1x256xf32>
    %85 = arith.mulf %83, %84 : vector<1x256xf32>
    %86 = arith.addf %80, %85 : vector<1x256xf32>
    %87 = vector.extract_strided_slice %67 {offsets = [3, 0], sizes = [1, 256], strides = [1, 1]} : vector<7x256xf32> to vector<1x256xf32>
    %c3_48 = arith.constant 3 : index
    %c0_49 = arith.constant 0 : index
    %c0_50 = arith.constant 0 : index
    %88 = vector.load %arg5[%c3_48, %c0_49, %c0_50] : memref<7x1x256xf32, #tpu.memory_space<vmem>>, vector<1x1x256xf32>
    %89 = vector.shape_cast %88 : vector<1x1x256xf32> to vector<1x256xf32>
    %90 = arith.mulf %89, %87 : vector<1x256xf32>
    %91 = arith.addf %86, %90 : vector<1x256xf32>
    %92 = vector.extract_strided_slice %67 {offsets = [4, 0], sizes = [1, 256], strides = [1, 1]} : vector<7x256xf32> to vector<1x256xf32>
    %c4_51 = arith.constant 4 : index
    %c0_52 = arith.constant 0 : index
    %c0_53 = arith.constant 0 : index
    %93 = vector.load %arg5[%c4_51, %c0_52, %c0_53] : memref<7x1x256xf32, #tpu.memory_space<vmem>>, vector<1x1x256xf32>
    %94 = vector.shape_cast %93 : vector<1x1x256xf32> to vector<1x256xf32>
    %c240_i32 = arith.constant 240 : i32
    %95 = tpu.dynamic_rotate %92 by %c240_i32 dim 1 : vector<1x256xf32>, i32 -> vector<1x256xf32>
    %96 = arith.mulf %94, %95 : vector<1x256xf32>
    %97 = arith.addf %91, %96 : vector<1x256xf32>
    %98 = vector.extract_strided_slice %67 {offsets = [5, 0], sizes = [1, 256], strides = [1, 1]} : vector<7x256xf32> to vector<1x256xf32>
    %c5_54 = arith.constant 5 : index
    %c0_55 = arith.constant 0 : index
    %c0_56 = arith.constant 0 : index
    %99 = vector.load %arg5[%c5_54, %c0_55, %c0_56] : memref<7x1x256xf32, #tpu.memory_space<vmem>>, vector<1x1x256xf32>
    %100 = vector.shape_cast %99 : vector<1x1x256xf32> to vector<1x256xf32>
    %c224_i32 = arith.constant 224 : i32
    %101 = tpu.dynamic_rotate %98 by %c224_i32 dim 1 : vector<1x256xf32>, i32 -> vector<1x256xf32>
    %102 = arith.mulf %100, %101 : vector<1x256xf32>
    %103 = arith.addf %97, %102 : vector<1x256xf32>
    %104 = vector.extract_strided_slice %67 {offsets = [6, 0], sizes = [1, 256], strides = [1, 1]} : vector<7x256xf32> to vector<1x256xf32>
    %c6_57 = arith.constant 6 : index
    %c0_58 = arith.constant 0 : index
    %c0_59 = arith.constant 0 : index
    %105 = vector.load %arg5[%c6_57, %c0_58, %c0_59] : memref<7x1x256xf32, #tpu.memory_space<vmem>>, vector<1x1x256xf32>
    %106 = vector.shape_cast %105 : vector<1x1x256xf32> to vector<1x256xf32>
    %c208_i32 = arith.constant 208 : i32
    %107 = tpu.dynamic_rotate %104 by %c208_i32 dim 1 : vector<1x256xf32>, i32 -> vector<1x256xf32>
    %108 = arith.mulf %106, %107 : vector<1x256xf32>
    %109 = arith.addf %103, %108 : vector<1x256xf32>
    %cst_60 = arith.constant 0.000000e+00 : f32
    %110 = vector.broadcast %cst_60 : f32 to vector<1x256xf32>
    %111 = arith.subf %110, %109 : vector<1x256xf32>
    %112 = math.exp %111 : vector<1x256xf32>
    %cst_61 = arith.constant 1.000000e+00 : f32
    %113 = vector.broadcast %cst_61 : f32 to vector<1x256xf32>
    %114 = arith.addf %113, %112 : vector<1x256xf32>
    %cst_62 = arith.constant 1.000000e+00 : f32
    %115 = vector.broadcast %cst_62 : f32 to vector<1x256xf32>
    %116 = arith.divf %115, %114 : vector<1x256xf32>
    %c0_63 = arith.constant 0 : index
    %c0_64 = arith.constant 0 : index
    %c0_65 = arith.constant 0 : index
    %117 = vector.load %arg7[%c0_63, %c0_64, %c0_65] : memref<1x16x256xf32, #tpu.memory_space<vmem>>, vector<1x16x256xf32>
    %118 = vector.shape_cast %116 : vector<1x256xf32> to vector<1x1x256xf32>
    %119 = vector.broadcast %118 : vector<1x1x256xf32> to vector<1x16x256xf32>
    %120 = arith.mulf %117, %119 : vector<1x16x256xf32>
    %c0_66 = arith.constant 0 : index
    %c0_67 = arith.constant 0 : index
    %c0_68 = arith.constant 0 : index
    %121 = vector.load %arg7[%c0_66, %c0_67, %c0_68] : memref<1x16x256xf32, #tpu.memory_space<vmem>>, vector<1x16x256xf32>
    tpu.vector_store %arg7[%c0_66, %c0_67, %c0_68], %120 {strides = array<i32>} : memref<1x16x256xf32, #tpu.memory_space<vmem>>, vector<1x16x256xf32>,
    return
  }
  func.func @transform_0(%arg0: i32) -> (i32, i32, i32) {
    %c0_i32 = arith.constant 0 : i32
    %c0_i32_0 = arith.constant 0 : i32
    %c0_i32_1 = arith.constant 0 : i32
    return %arg0, %c0_i32, %c0_i32_0 : i32, i32, i32
  }
  func.func @transform_1(%arg0: i32) -> (i32, i32) {
    %c0_i32 = arith.constant 0 : i32
    %c0_i32_0 = arith.constant 0 : i32
    %c0_i32_1 = arith.constant 0 : i32
    return %c0_i32, %c0_i32_0 : i32, i32
  }
  func.func @transform_2(%arg0: i32) -> (i32, i32) {
    %c0_i32 = arith.constant 0 : i32
    %c0_i32_0 = arith.constant 0 : i32
    %c0_i32_1 = arith.constant 0 : i32
    return %c0_i32, %c0_i32_0 : i32, i32
  }
  func.func @transform_3(%arg0: i32) -> (i32, i32, i32) {
    %c0_i32 = arith.constant 0 : i32
    %c0_i32_0 = arith.constant 0 : i32
    %c0_i32_1 = arith.constant 0 : i32
    %c0_i32_2 = arith.constant 0 : i32
    return %c0_i32, %c0_i32_0, %c0_i32_1 : i32, i32, i32
  }
  func.func @transform_4(%arg0: i32) -> (i32, i32, i32) {
    %c0_i32 = arith.constant 0 : i32
    %c0_i32_0 = arith.constant 0 : i32
    %c0_i32_1 = arith.constant 0 : i32
    %c0_i32_2 = arith.constant 0 : i32
    return %c0_i32, %c0_i32_0, %c0_i32_1 : i32, i32, i32
  }
  func.func @transform_5(%arg0: i32) -> (i32, i32) {
    %c0_i32 = arith.constant 0 : i32
    %c0_i32_0 = arith.constant 0 : i32
    %c0_i32_1 = arith.constant 0 : i32
    return %c0_i32, %c0_i32_0 : i32, i32
  }
  func.func @transform_6(%arg0: i32) -> (i32, i32, i32) {
    %c0_i32 = arith.constant 0 : i32
    %c0_i32_0 = arith.constant 0 : i32
    %c0_i32_1 = arith.constant 0 : i32
    return %arg0, %c0_i32, %c0_i32_0 : i32, i32, i32
  }
}

</mosaic_0001>

<llo_original>
// kernel: tpu_custom_call.1
$region0: #{tpu_custom_call.1}
  #allocation0 [shape = 'u32[]', space=smem, size = 0x4, offset = 0x4, fixed_abs, tag = 'smem constant byte address 0x4 - core index']
  #allocation1 [shape = 'u32[144,128]{1,0:T(1,128)}', space=vmem, size = 0x12000, scoped, tag = 'internal scratch']
  %s0 = inlined_call_operand.hbm [shape: f32[4,16,256], index: 0, kind: input, shape index: {}]
  %s1 = inlined_call_operand.vmem [shape: f32[16,2], index: 1, kind: input, shape index: {}]
  %s2 = inlined_call_operand.hbm [shape: f32[2,16], index: 2, kind: input, shape index: {}]
  %s3 = inlined_call_operand.vmem [shape: f32[7,1,256], index: 3, kind: input, shape index: {}]
  %s4 = inlined_call_operand.vmem [shape: f32[7,1,256], index: 4, kind: input, shape index: {}]
  %s5 = inlined_call_operand.vmem [shape: f32[7,14], index: 5, kind: input, shape index: {}]
  %s6 = inlined_call_operand.hbm [shape: f32[4,16,256], index: 6, kind: output, shape index: {}]
  %s7 = sld [smem:[#allocation0]]
  $region65: #{tpu_custom_call.1} parent=0
    _
  %s9 = ssub.s32 1, %s7
  %s10 = scalar_select 0, %s9, %s7
  $region1: #{tpu_custom_call.1} parent=0
    #allocation2 [shape = 'u8[32768]{0}', space=vmem, size = 0x8000, scoped, tag = 'input window, operand 0']
    #allocation3 [shape = 's32[2]{0}', space=sflag, size = 0x8, scoped, tag = 'scoped memory for tpu_custom_call.1']
    #allocation4 [shape = 's32[2]{0}', space=sflag, size = 0x8, scoped, tag = 'scoped memory for tpu_custom_call.1']
    #allocation5 [shape = 'u8[1024]{0}', space=vmem, size = 0x400, scoped, tag = 'input window, operand 2, single buffered']
    #allocation6 [shape = 's32[1]{0}', space=sflag, size = 0x4, scoped, tag = 'scoped memory for tpu_custom_call.1']
    #allocation7 [shape = 'u8[32768]{0}', space=vmem, size = 0x8000, scoped, tag = 'output window, operand 0']
    %11 = vsyncpa [#allocation3], 0
    %s12 = scalar_lea.sflag [#allocation3], 1
    %13 = vsyncpa %s12, 0
    %14 = vsyncpa [#allocation6], 0
    %15 = vsyncpa [#allocation4], 0
    %s16 = scalar_lea.sflag [#allocation4], 1
    %17 = vsyncpa %s16, 0
    loop: start=0, step=1, limit=6
    $region2: #{tpu_custom_call.1} parent=1 // loop_pre_header
      _
    $region3: #{tpu_custom_call.1} parent=1 // loop_header
      %s19 = sphi 0, %s23
      %p20 = scmp.ge.s32.totalorder %s19, 6
      %s29 = sphi 0, %s31
      %s32 = sphi 0, %s29
      %s33 = sphi 0, %s32
      %s49 = sphi 0, %s33
      %s53 = sphi 0, %s53
      %s55 = sphi 0, %s53
      %s56 = sphi 0, %s55
      %s70 = sphi 0, %s56
      %s74 = sphi 0, %s74
      %s76 = sphi 0, %s74
      %s77 = sphi 0, %s76
      %s91 = sphi 0, %s77
      %s95 = sphi 0, %s95
      %s97 = sphi 0, %s95
      %s98 = sphi 0, %s97
      %s112 = sphi 0, %s98
      %s116 = sphi 0, %s116
      %s118 = sphi 0, %s116
      %s119 = sphi 0, %s118
      %s133 = sphi 0, %s119
      %s137 = sphi 0, %s137
      %s139 = sphi 0, %s137
      %s140 = sphi 0, %s139
      %s154 = sphi 0, %s140
      %s160 = sphi 0, %s162
      %s163 = sphi 0, %s160
      %s164 = sphi 0, %s163
      %s180 = sphi 0, %s164
    $region4: #{tpu_custom_call.1} parent=1 // loop_header_branch
      %22 = sbr.rel (%p20) target = $region8
    $region5: #{tpu_custom_call.1} parent=1 // loop_body
      %s24 = ssub.s32 %s19, 1
      %s25 = ssub.s32 %s19, 2
      %s26 = sadd.s32 %s19, 1
      %s27 = ssub.s32 %s19, %s26
      %p28 = scmp.eq.s32.totalorder %s27, 0
      %s30 = sadd.s32 %s29, 1
      %s31 = scalar_select %p28, %s29, %s30
      %p34 = pneg %p28
      %p35 = scmp.eq.s32.totalorder %s19, 3
      %p36 = por %p34, %p35
      %p37 = scmp.ne.s32.totalorder %s29, %s32
      %p38 = scmp.eq.s32.totalorder %s19, 0
      %p39 = por %p37, %p38
      %p40 = scmp.ne.s32.totalorder %s29, %s32
      %p41 = scmp.eq.s32.totalorder %s24, 3
      %p42 = por %p40, %p41
      %p43 = scmp.ne.s32.totalorder %s32, %s33
      %p44 = scmp.eq.s32.totalorder %s24, 0
      %p45 = por %p43, %p44
      %p46 = scmp.ne.s32.totalorder %s32, %s33
      %p47 = scmp.eq.s32.totalorder %s25, 3
      %p48 = por %p46, %p47
      %p50 = scmp.ne.s32.totalorder %s33, %s49
      %p51 = scmp.eq.s32.totalorder %s25, 0
      %p52 = por %p50, %p51
      %s54 = sadd.s32 %s53, 1
      %p57 = scmp.eq.s32.totalorder %s19, 3
      %p58 = scmp.ne.s32.totalorder %s53, %s55
      %p59 = scmp.eq.s32.totalorder %s19, 0
      %p60 = por %p58, %p59
      %p61 = scmp.ne.s32.totalorder %s53, %s55
      %p62 = scmp.eq.s32.totalorder %s24, 3
      %p63 = por %p61, %p62
      %p64 = scmp.ne.s32.totalorder %s55, %s56
      %p65 = scmp.eq.s32.totalorder %s24, 0
      %p66 = por %p64, %p65
      %p67 = scmp.ne.s32.totalorder %s55, %s56
      %p68 = scmp.eq.s32.totalorder %s25, 3
      %p69 = por %p67, %p68
      %p71 = scmp.ne.s32.totalorder %s56, %s70
      %p72 = scmp.eq.s32.totalorder %s25, 0
      %p73 = por %p71, %p72
      %s75 = sadd.s32 %s74, 1
      %p78 = scmp.eq.s32.totalorder %s19, 3
      %p79 = scmp.ne.s32.totalorder %s74, %s76
      %p80 = scmp.eq.s32.totalorder %s19, 0
      %p81 = por %p79, %p80
      %p82 = scmp.ne.s32.totalorder %s74, %s76
      %p83 = scmp.eq.s32.totalorder %s24, 3
      %p84 = por %p82, %p83
      %p85 = scmp.ne.s32.totalorder %s76, %s77
      %p86 = scmp.eq.s32.totalorder %s24, 0
      %p87 = por %p85, %p86
      %p88 = scmp.ne.s32.totalorder %s76, %s77
      %p89 = scmp.eq.s32.totalorder %s25, 3
      %p90 = por %p88, %p89
      %p92 = scmp.ne.s32.totalorder %s77, %s91
      %p93 = scmp.eq.s32.totalorder %s25, 0
      %p94 = por %p92, %p93
      %s96 = sadd.s32 %s95, 1
      %p99 = scmp.eq.s32.totalorder %s19, 3
      %p100 = scmp.ne.s32.totalorder %s95, %s97
      %p101 = scmp.eq.s32.totalorder %s19, 0
      %p102 = por %p100, %p101
      %p103 = scmp.ne.s32.totalorder %s95, %s97
      %p104 = scmp.eq.s32.totalorder %s24, 3
      %p105 = por %p103, %p104
      %p106 = scmp.ne.s32.totalorder %s97, %s98
      %p107 = scmp.eq.s32.totalorder %s24, 0
      %p108 = por %p106, %p107
      %p109 = scmp.ne.s32.totalorder %s97, %s98
      %p110 = scmp.eq.s32.totalorder %s25, 3
      %p111 = por %p109, %p110
      %p113 = scmp.ne.s32.totalorder %s98, %s112
      %p114 = scmp.eq.s32.totalorder %s25, 0
      %p115 = por %p113, %p114
      %s117 = sadd.s32 %s116, 1
      %p120 = scmp.eq.s32.totalorder %s19, 3
      %p121 = scmp.ne.s32.totalorder %s116, %s118
      %p122 = scmp.eq.s32.totalorder %s19, 0
      %p123 = por %p121, %p122
      %p124 = scmp.ne.s32.totalorder %s116, %s118
      %p125 = scmp.eq.s32.totalorder %s24, 3
      %p126 = por %p124, %p125
      %p127 = scmp.ne.s32.totalorder %s118, %s119
      %p128 = scmp.eq.s32.totalorder %s24, 0
      %p129 = por %p127, %p128
      %p130 = scmp.ne.s32.totalorder %s118, %s119
      %p131 = scmp.eq.s32.totalorder %s25, 3
      %p132 = por %p130, %p131
      %p134 = scmp.ne.s32.totalorder %s119, %s133
      %p135 = scmp.eq.s32.totalorder %s25, 0
      %p136 = por %p134, %p135
      %s138 = sadd.s32 %s137, 1
      %p141 = scmp.eq.s32.totalorder %s19, 3
      %p142 = scmp.ne.s32.totalorder %s137, %s139
      %p143 = scmp.eq.s32.totalorder %s19, 0
      %p144 = por %p142, %p143
      %p145 = scmp.ne.s32.totalorder %s137, %s139
      %p146 = scmp.eq.s32.totalorder %s24, 3
      %p147 = por %p145, %p146
      %p148 = scmp.ne.s32.totalorder %s139, %s140
      %p149 = scmp.eq.s32.totalorder %s24, 0
      %p150 = por %p148, %p149
      %p151 = scmp.ne.s32.totalorder %s139, %s140
      %p152 = scmp.eq.s32.totalorder %s25, 3
      %p153 = por %p151, %p152
      %p155 = scmp.ne.s32.totalorder %s140, %s154
      %p156 = scmp.eq.s32.totalorder %s25, 0
      %p157 = por %p155, %p156
      %s158 = ssub.s32 %s19, %s26
      %p159 = scmp.eq.s32.totalorder %s158, 0
      %s161 = sadd.s32 %s160, 1
      %s162 = scalar_select %p159, %s160, %s161
      %p165 = pneg %p159
      %p166 = scmp.eq.s32.totalorder %s19, 3
      %p167 = por %p165, %p166
      %p168 = scmp.ne.s32.totalorder %s160, %s163
      %p169 = scmp.eq.s32.totalorder %s19, 0
      %p170 = por %p168, %p169
      %p171 = scmp.ne.s32.totalorder %s160, %s163
      %p172 = scmp.eq.s32.totalorder %s24, 3
      %p173 = por %p171, %p172
      %p174 = scmp.ne.s32.totalorder %s163, %s164
      %p175 = scmp.eq.s32.totalorder %s24, 0
      %p176 = por %p174, %p175
      %p177 = scmp.ne.s32.totalorder %s163, %s164
      %p178 = scmp.eq.s32.totalorder %s25, 3
      %p179 = por %p177, %p178
      %p181 = scmp.ne.s32.totalorder %s164, %s180
      %p182 = scmp.eq.s32.totalorder %s25, 0
      %p183 = por %p181, %p182
      %p184 = scmp.le.s32.totalorder 1, %s19
      %p185 = scmp.lt.s32.totalorder %s19, 5
      %p186 = pnand %p184, %p185
      %p187 = pneg %p186
      // Predicated region
      $region9: #{tpu_custom_call.1} parent=5 // pred_check
        _
      $region10: #{tpu_custom_call.1} parent=5 // pred_check_branch
        %189 = sbr.rel (%p186) target = $region12
      $region11: #{tpu_custom_call.1} parent=5 // pred_region
        %s190 = ssub.s32 %s19, 1
        // Predicated region
        $region13: #{tpu_custom_call.1} parent=11 // pred_check
          %p191 = pneg %p66
        $region14: #{tpu_custom_call.1} parent=11 // pred_check_branch
          %193 = sbr.rel (%p191) target = $region16
        $region15: #{tpu_custom_call.1} parent=11 // pred_region
          _
        $region16: #{tpu_custom_call.1} parent=11 // pred_fallthru
          _
        // Predicated region
        $region17: #{tpu_custom_call.1} parent=11 // pred_check
          %p194 = pneg %p87
        $region18: #{tpu_custom_call.1} parent=11 // pred_check_branch
          %196 = sbr.rel (%p194) target = $region20
        $region19: #{tpu_custom_call.1} parent=11 // pred_region
          %s198 = ssub.s32 32, 32
          %199 = vsyncadd [#allocation6], %s198
          %s201 = sshll.u32 [#allocation5], 4
          %s202 = int_to_ptr.vmem [resolvable:$true] %s201
          %204 = dma.hbm_to_vmem [thread:$0]  %s2, 32, %s202, [#allocation6]
        $region20: #{tpu_custom_call.1} parent=11 // pred_fallthru
          _
        // Predicated region
        $region21: #{tpu_custom_call.1} parent=11 // pred_check
          %p205 = pneg %p108
        $region22: #{tpu_custom_call.1} parent=11 // pred_check_branch
          %207 = sbr.rel (%p205) target = $region24
        $region23: #{tpu_custom_call.1} parent=11 // pred_region
          _
        $region24: #{tpu_custom_call.1} parent=11 // pred_fallthru
          _
        // Predicated region
        $region25: #{tpu_custom_call.1} parent=11 // pred_check
          %p208 = pneg %p129
        $region26: #{tpu_custom_call.1} parent=11 // pred_check_branch
          %210 = sbr.rel (%p208) target = $region28
        $region27: #{tpu_custom_call.1} parent=11 // pred_region
          _
        $region28: #{tpu_custom_call.1} parent=11 // pred_fallthru
          _
        // Predicated region
        $region29: #{tpu_custom_call.1} parent=11 // pred_check
          %p211 = pneg %p150
        $region30: #{tpu_custom_call.1} parent=11 // pred_check_branch
          %213 = sbr.rel (%p211) target = $region32
        $region31: #{tpu_custom_call.1} parent=11 // pred_region
          _
        $region32: #{tpu_custom_call.1} parent=11 // pred_fallthru
          _
      $region12: #{tpu_custom_call.1} parent=5 // pred_fallthru
        _
      %p214 = scmp.lt.s32.totalorder %s19, 4
      // Predicated region
      $region33: #{tpu_custom_call.1} parent=5 // pred_check
        %p215 = pneg %p214
      $region34: #{tpu_custom_call.1} parent=5 // pred_check_branch
        %217 = sbr.rel (%p215) target = $region36
      $region35: #{tpu_custom_call.1} parent=5 // pred_region
        // Predicated region
        $region37: #{tpu_custom_call.1} parent=35 // pred_check
          %p218 = pneg %p39
        $region38: #{tpu_custom_call.1} parent=35 // pred_check_branch
          %220 = sbr.rel (%p218) target = $region40
        $region39: #{tpu_custom_call.1} parent=35 // pred_region
          %s221 = sand.u32 %s29, 1
          %s222 = scalar_lea.sflag [#allocation3], %s221
          %s223 = sand.u32 %s29, 1
          %s224 = smul.addr %s223, 32
          %s225 = scalar_lea.vmem [#allocation2], %s224
          %s227 = ssub.s32 512, 512
          %228 = vsyncadd %s222, %s227
          %s229 = smul.addr %s19, 4
          %s230 = smul.addr %s229, 128
          %s231 = scalar_lea.hbm %s0, %s230
          %s232 = sshll.u32 %s225, 4
          %s233 = int_to_ptr.vmem [resolvable:$true] %s232
          %238 = dma.hbm_to_vmem [thread:$0]  %s231, 512, %s233, %s222, 256, 256, 16
        $region40: #{tpu_custom_call.1} parent=35 // pred_fallthru
          _
      $region36: #{tpu_custom_call.1} parent=5 // pred_fallthru
        _
      %p239 = scmp.le.s32.totalorder 1, %s19
      %p240 = scmp.lt.s32.totalorder %s19, 5
      %p241 = pnand %p239, %p240
      %p242 = pneg %p241
      // Predicated region
      $region41: #{tpu_custom_call.1} parent=5 // pred_check
        _
      $region42: #{tpu_custom_call.1} parent=5 // pred_check_branch
        %244 = sbr.rel (%p241) target = $region44
      $region43: #{tpu_custom_call.1} parent=5 // pred_region
        %s245 = ssub.s32 %s19, 1
        %s246 = sand.u32 %s32, 1
        %s247 = scalar_lea.sflag [#allocation3], %s246
        %s248 = sand.u32 %s32, 1
        %s249 = smul.addr %s248, 32
        %s250 = scalar_lea.vmem [#allocation2], %s249
        // Predicated region
        $region45: #{tpu_custom_call.1} parent=43 // pred_check
          %p251 = pneg %p45
        $region46: #{tpu_custom_call.1} parent=43 // pred_check_branch
          %253 = sbr.rel (%p251) target = $region48
        $region47: #{tpu_custom_call.1} parent=43 // pred_region
          %254 = dma.done %s247, 512
        $region48: #{tpu_custom_call.1} parent=43 // pred_fallthru
          _
        // Predicated region
        $region49: #{tpu_custom_call.1} parent=43 // pred_check
          %p255 = pneg %p87
        $region50: #{tpu_custom_call.1} parent=43 // pred_check_branch
          %257 = sbr.rel (%p255) target = $region52
        $region51: #{tpu_custom_call.1} parent=43 // pred_region
          %258 = dma.done [#allocation6], 32
        $region52: #{tpu_custom_call.1} parent=43 // pred_fallthru
          _
        %s259 = sand.u32 %s32, 1
        %s260 = scalar_lea.sflag [#allocation3], %s259
        %s261 = sand.u32 %s32, 1
        %s262 = smul.addr %s261, 32
        %s263 = scalar_lea.vmem [#allocation2], %s262
        %p264 = pneg %p45
        %p265 = pneg %p42
        %p266 = pneg %p66
        %p267 = pneg %p63
        %p268 = pneg %p87
        %p269 = pneg %p84
        %p270 = pneg %p108
        %p271 = pneg %p105
        %p272 = pneg %p129
        %p273 = pneg %p126
        %p274 = pneg %p150
        %p275 = pneg %p147
        %p276 = pneg %p176
        %p277 = pneg %p173
        %s278 = sand.u32 %s163, 1
        %s279 = scalar_lea.sflag [#allocation4], %s278
        %s280 = sand.u32 %s163, 1
        %s281 = smul.addr %s280, 32
        %s282 = scalar_lea.vmem [#allocation7], %s281
        %v283 = vld [vmem:[%s250] sm:$0xff]
        %v284 = vld [vmem:[%s250 + $0x8] sm:$0xff]
        %v285 = vld [vmem:[%s250 + $0x10] sm:$0xff]
        %v286 = vld [vmem:[%s250 + $0x18] sm:$0xff]
        %v287 = vadd.f32 %v283, %v284
        %288 = vadd.xlane.f32.xlu0 %v287
        %v289 = vpop.xlane.xlu0 %288
        %v290 = vadd.f32 %v285, %v286
        %291 = vadd.xlane.f32.xlu0 %v290
        %v292 = vpop.xlane.xlu0 %291
        %v293 = vmul.f32 %v289, 0.00390625
        %v294 = vmul.f32 %v292, 0.00390625
        %v295 = vmax.f32 %v283, %v284
        %296 = vmax.xlane.f32.xlu0 %v295
        %v297 = vpop.xlane.xlu0 %296
        %v298 = vmax.f32 %v285, %v286
        %299 = vmax.xlane.f32.xlu0 %v298
        %v300 = vpop.xlane.xlu0 %299
        %v303 = vlaneseq
        %v304 = vand.u32 %v303, 127
        %v305 = vlaneseq
        %v306 = vshrl.u32 %v305, 7
        %v307 = vsub.s32 %v304, %v306
        %v308 = vrot.slane %v293, %v307
        %v309 = vadd.s32 %v304, 4294967288
        %v310 = vlaneseq
        %v311 = vshrl.u32 %v310, 7
        %v312 = vsub.s32 %v309, %v311
        %v313 = vrot.slane %v294, %v312
        %vm314 = vcmask 130112
        %v315 = vsel %vm314, %v313, %v308
        %v319 = vlaneseq
        %v320 = vshrl.u32 %v319, 7
        %v321 = vsub.s32 %v304, %v320
        %v322 = vrot.slane %v297, %v321
        %v323 = vlaneseq
        %v324 = vshrl.u32 %v323, 7
        %v325 = vsub.s32 %v309, %v324
        %v326 = vrot.slane %v300, %v325
        %v327 = vsel %vm314, %v326, %v322
        %vm329 = vcmask 1040384
        %v330 = vsel %vm329, %v315, %v327
        %v331 = vld [vmem:[%s1] sm:$0xff]
        %v332 = vld [vmem:[%s1 + $0x8] sm:$0xff]
        %vm333 = vcmask 130048
        %v335 = vsel %vm333, %v330, 0
        %337 = vmatprep.subr.mxu0 0.0
        %338 = vmatpush1.msra.mxu0 %v331
        %339 = vmatprep.subr.mxu0 0.0
        %340 = vmatpush1.msra.mxu0 %v332
        %341 = vmatprep.subr.mxu0 0.0
        %342 = vmatpush1.msra.mxu0 0.0
        %343 = vmatprep.subr.mxu0 0.0
        %344 = vmatpush1.msra.mxu0 0.0
        %345 = vmatprep.subr.mxu0 0.0
        %346 = vmatpush1.msra.mxu0 0.0
        %347 = vmatprep.subr.mxu0 0.0
        %348 = vmatpush1.msra.mxu0 0.0
        %349 = vmatprep.subr.mxu0 0.0
        %350 = vmatpush1.msra.mxu0 0.0
        %351 = vmatprep.subr.mxu0 0.0
        %352 = vmatpush1.msra.mxu0 0.0
        %353 = vmatprep.subr.mxu0 0.0
        %354 = vmatpush1.msra.mxu0 0.0
        %355 = vmatprep.subr.mxu0 0.0
        %356 = vmatpush1.msra.mxu0 0.0
        %357 = vmatprep.subr.mxu0 0.0
        %358 = vmatpush1.msra.mxu0 0.0
        %359 = vmatprep.subr.mxu0 0.0
        %360 = vmatpush1.msra.mxu0 0.0
        %361 = vmatprep.subr.mxu0 0.0
        %362 = vmatpush1.msra.mxu0 0.0
        %363 = vmatprep.subr.mxu0 0.0
        %364 = vmatpush1.msra.mxu0 0.0
        %365 = vmatprep.subr.mxu0 0.0
        %366 = vmatpush1.msra.mxu0 0.0
        %367 = vmatprep.subr.mxu0 0.0
        %368 = vmatpush1.msra.mxu0 0.0
        %369 = vmatprep.subr.mxu0 0.0
        %370 = vmatpush1.msra.mxu0 0.0
        %371 = vmatprep.subr.mxu0 0.0
        %372 = vmatpush1.msra.mxu0 0.0
        %373 = vmatprep.subr.mxu0 0.0
        %374 = vmatpush1.msra.mxu0 0.0
        %375 = vmatprep.subr.mxu0 0.0
        %376 = vmatpush1.msra.mxu0 0.0
        %377 = vmatprep.subr.mxu0 0.0
        %378 = vmatpush1.msra.mxu0 0.0
        %379 = vmatprep.subr.mxu0 0.0
        %380 = vmatpush1.msra.mxu0 0.0
        %381 = vmatprep.subr.mxu0 0.0
        %382 = vmatpush1.msra.mxu0 0.0
        %383 = vmatprep.subr.mxu0 0.0
        %384 = vmatpush1.msra.mxu0 0.0
        %385 = vmatprep.subr.mxu0 0.0
        %386 = vmatpush1.msra.mxu0 0.0
        %387 = vmatprep.subr.mxu0 0.0
        %388 = vmatpush1.msra.mxu0 0.0
        %389 = vmatprep.subr.mxu0 0.0
        %390 = vmatpush1.msra.mxu0 0.0
        %391 = vmatprep.subr.mxu0 0.0
        %392 = vmatpush1.msra.mxu0 0.0
        %393 = vmatprep.subr.mxu0 0.0
        %394 = vmatpush1.msra.mxu0 0.0
        %395 = vmatprep.subr.mxu0 0.0
        %396 = vmatpush1.msra.mxu0 0.0
        %397 = vmatprep.subr.mxu0 0.0
        %398 = vmatpush1.msra.mxu0 0.0
        %399 = vmatprep.subr.mxu0 0.0
        %400 = vmatpush1.msra.mxu0 0.0
        %401 = vmatprep.mubr.f32.mxu0 0.0
        %402 = vmatmul.mubr.f32.gmra.mrb[0].mxu0 %v335
        %v403 = vpop.f32.mrb[0].mxu0
        %v404 = vadd.f32 0.0, %v403
        %v405 = vpop.f32.mrb[0].mxu0
        %406 = vdwg.mxu0
        %v407 = vmax.f32 %v404, 0.0
        %v408 = vld [vmem:[#allocation5] sm:$0x3]
        %vm409 = vcmask 15360
        %v411 = vsel %vm409, %v407, 0
        %vm413 = vcmask 1041408
        %v415 = vsel %vm413, %v408, 0
        %417 = vmatprep.subr.mxu0 0.0
        %418 = vmatpush1.msra.mxu0 %v415
        %419 = vmatprep.subr.mxu0 0.0
        %420 = vmatpush1.msra.mxu0 0.0
        %421 = vmatprep.subr.mxu0 0.0
        %422 = vmatpush1.msra.mxu0 0.0
        %423 = vmatprep.subr.mxu0 0.0
        %424 = vmatpush1.msra.mxu0 0.0
        %425 = vmatprep.subr.mxu0 0.0
        %426 = vmatpush1.msra.mxu0 0.0
        %427 = vmatprep.subr.mxu0 0.0
        %428 = vmatpush1.msra.mxu0 0.0
        %429 = vmatprep.subr.mxu0 0.0
        %430 = vmatpush1.msra.mxu0 0.0
        %431 = vmatprep.subr.mxu0 0.0
        %432 = vmatpush1.msra.mxu0 0.0
        %433 = vmatprep.subr.mxu0 0.0
        %434 = vmatpush1.msra.mxu0 0.0
        %435 = vmatprep.subr.mxu0 0.0
        %436 = vmatpush1.msra.mxu0 0.0
        %437 = vmatprep.subr.mxu0 0.0
        %438 = vmatpush1.msra.mxu0 0.0
        %439 = vmatprep.subr.mxu0 0.0
        %440 = vmatpush1.msra.mxu0 0.0
        %441 = vmatprep.subr.mxu0 0.0
        %442 = vmatpush1.msra.mxu0 0.0
        %443 = vmatprep.subr.mxu0 0.0
        %444 = vmatpush1.msra.mxu0 0.0
        %445 = vmatprep.subr.mxu0 0.0
        %446 = vmatpush1.msra.mxu0 0.0
        %447 = vmatprep.subr.mxu0 0.0
        %448 = vmatpush1.msra.mxu0 0.0
        %449 = vmatprep.subr.mxu0 0.0
        %450 = vmatpush1.msra.mxu0 0.0
        %451 = vmatprep.subr.mxu0 0.0
        %452 = vmatpush1.msra.mxu0 0.0
        %453 = vmatprep.subr.mxu0 0.0
        %454 = vmatpush1.msra.mxu0 0.0
        %455 = vmatprep.subr.mxu0 0.0
        %456 = vmatpush1.msra.mxu0 0.0
        %457 = vmatprep.subr.mxu0 0.0
        %458 = vmatpush1.msra.mxu0 0.0
        %459 = vmatprep.subr.mxu0 0.0
        %460 = vmatpush1.msra.mxu0 0.0
        %461 = vmatprep.subr.mxu0 0.0
        %462 = vmatpush1.msra.mxu0 0.0
        %463 = vmatprep.subr.mxu0 0.0
        %464 = vmatpush1.msra.mxu0 0.0
        %465 = vmatprep.subr.mxu0 0.0
        %466 = vmatpush1.msra.mxu0 0.0
        %467 = vmatprep.subr.mxu0 0.0
        %468 = vmatpush1.msra.mxu0 0.0
        %469 = vmatprep.subr.mxu0 0.0
        %470 = vmatpush1.msra.mxu0 0.0
        %471 = vmatprep.subr.mxu0 0.0
        %472 = vmatpush1.msra.mxu0 0.0
        %473 = vmatprep.subr.mxu0 0.0
        %474 = vmatpush1.msra.mxu0 0.0
        %475 = vmatprep.subr.mxu0 0.0
        %476 = vmatpush1.msra.mxu0 0.0
        %477 = vmatprep.subr.mxu0 0.0
        %478 = vmatpush1.msra.mxu0 0.0
        %479 = vmatprep.subr.mxu0 0.0
        %480 = vmatpush1.msra.mxu0 0.0
        %481 = vmatprep.mubr.f32.mxu0 0.0
        %482 = vmatmul.mubr.f32.gmra.mrb[0].mxu0 %v411
        %v483 = vpop.f32.mrb[0].mxu0
        %v484 = vadd.f32 0.0, %v483
        %v485 = vpop.f32.mrb[0].mxu0
        %486 = vdwg.mxu0
        %v488 = vrot.slane %v484, 1
        %v490 = vadd.f32 %v484, %v488
        %v491 = vsub.f32 0.0, %v490
        %v492 = vmul.f32 %v491, 1.442695
        %v493 = vpow.pop %v492
        %v494 = vadd.f32 %v493, 1.0
        %v495 = vrcp.pop %v494
        %v496 = vmul.f32 1.0, %v495
        %v497 = vlaneseq
        %v498 = vshrl.u32 %v497, 7
        %v499 = vsub.s32 0, %v498
        %v500 = vrot.slane %v496, %v499
        %502 = vbcast.lane.b32.xlu0 %v500, 256
        %v503 = vpop.permute.xlu0 %502
        %s505 = sor.u32 256, 8
        %506 = vbcast.lane.b32.xlu0 %v500, %s505
        %v507 = vpop.permute.xlu0 %506
        %v508 = vmul.f32 %v283, %v503
        %v509 = vmul.f32 %v284, %v503
        %v510 = vmul.f32 %v285, %v507
        %v511 = vmul.f32 %v286, %v507
        %512 = vst [vmem:[%s282] sm:$0xff] %v508
        %513 = vst [vmem:[%s282 + $0x8] sm:$0xff] %v509
        %514 = vst [vmem:[%s282 + $0x10] sm:$0xff] %v510
        %515 = vst [vmem:[%s282 + $0x18] sm:$0xff] %v511
        %v516 = vadd.f32 %v508, %v510
        %v517 = vrot.slane %v516, 4
        %v518 = vadd.f32 %v516, %v517
        %v519 = vrot.slane %v518, 2
        %v520 = vadd.f32 %v518, %v519
        %v521 = vrot.slane %v520, 1
        %v522 = vadd.f32 %v520, %v521
        %v523 = vadd.f32 %v509, %v511
        %v524 = vrot.slane %v523, 4
        %v525 = vadd.f32 %v523, %v524
        %v526 = vrot.slane %v525, 2
        %v527 = vadd.f32 %v525, %v526
        %v528 = vrot.slane %v527, 1
        %v529 = vadd.f32 %v527, %v528
        %v530 = vrcp.pop 16.0
        %v531 = vmul.f32 %v522, %v530
        %v532 = vmul.f32 %v529, %v530
        %v533 = vmax.f32 %v508, %v510
        %v534 = vrot.slane %v533, 4
        %v535 = vmax.f32 %v533, %v534
        %v536 = vrot.slane %v535, 2
        %v537 = vmax.f32 %v535, %v536
        %v538 = vrot.slane %v537, 1
        %v539 = vmax.f32 %v537, %v538
        %v540 = vmax.f32 %v509, %v511
        %v541 = vrot.slane %v540, 4
        %v542 = vmax.f32 %v540, %v541
        %v543 = vrot.slane %v542, 2
        %v544 = vmax.f32 %v542, %v543
        %v545 = vrot.slane %v544, 1
        %v546 = vmax.f32 %v544, %v545
        %v547 = vsel %vm329, %v531, %v539
        %v548 = vsel %vm329, %v532, %v546
        %549 = vrot.lane.b32.xlu0 %v547, 3
        %v550 = vpop.permute.xlu0 %549
        %551 = vrot.lane.b32.xlu0 %v548, 3
        %v552 = vpop.permute.xlu0 %551
        %vm553 = vcmp.lt.s32.totalorder %v304, 3
        %v554 = vsel %vm553, %v550, %v552
        %v555 = vsel %vm553, %v552, %v550
        %v556 = vld [vmem:[%s3] sm:$0x3]
        %v558 = vlaneseq
        %v559 = vshrl.u32 %v558, 7
        %v560 = vsub.s32 0, %v559
        %v561 = vrot.slane %v556, %v560
        %v562 = vlaneseq
        %v563 = vshrl.u32 %v562, 7
        %v564 = vsub.s32 1, %v563
        %v565 = vrot.slane %v556, %v564
        %v568 = vmul.f32 %v555, %v561
        %v569 = vmul.f32 %v554, %v565
        %570 = vrot.lane.b32.xlu0 %v547, 2
        %v571 = vpop.permute.xlu0 %570
        %572 = vrot.lane.b32.xlu0 %v548, 2
        %v573 = vpop.permute.xlu0 %572
        %vm574 = vcmp.lt.s32.totalorder %v304, 2
        %v575 = vsel %vm574, %v571, %v573
        %v576 = vsel %vm574, %v573, %v571
        %s577 = scalar_lea.vmem %s3, 2
        %v578 = vld [vmem:[%s577] sm:$0x3]
        %v580 = vlaneseq
        %v581 = vshrl.u32 %v580, 7
        %v582 = vsub.s32 0, %v581
        %v583 = vrot.slane %v578, %v582
        %v584 = vlaneseq
        %v585 = vshrl.u32 %v584, 7
        %v586 = vsub.s32 1, %v585
        %v587 = vrot.slane %v578, %v586
        %v590 = vmul.f32 %v576, %v583
        %v591 = vmul.f32 %v575, %v587
        %592 = vrot.lane.b32.xlu0 %v547, 1
        %v593 = vpop.permute.xlu0 %592
        %594 = vrot.lane.b32.xlu0 %v548, 1
        %v595 = vpop.permute.xlu0 %594
        %vm596 = vcmp.lt.s32.totalorder %v304, 1
        %v597 = vsel %vm596, %v593, %v595
        %v598 = vsel %vm596, %v595, %v593
        %s599 = scalar_lea.vmem %s3, 4
        %v600 = vld [vmem:[%s599] sm:$0x3]
        %v602 = vlaneseq
        %v603 = vshrl.u32 %v602, 7
        %v604 = vsub.s32 0, %v603
        %v605 = vrot.slane %v600, %v604
        %v606 = vlaneseq
        %v607 = vshrl.u32 %v606, 7
        %v608 = vsub.s32 1, %v607
        %v609 = vrot.slane %v600, %v608
        %v612 = vmul.f32 %v598, %v605
        %v613 = vmul.f32 %v597, %v609
        %s614 = scalar_lea.vmem %s3, 6
        %v615 = vld [vmem:[%s614] sm:$0x3]
        %v617 = vlaneseq
        %v618 = vshrl.u32 %v617, 7
        %v619 = vsub.s32 0, %v618
        %v620 = vrot.slane %v615, %v619
        %v621 = vlaneseq
        %v622 = vshrl.u32 %v621, 7
        %v623 = vsub.s32 1, %v622
        %v624 = vrot.slane %v615, %v623
        %v627 = vmul.f32 %v547, %v620
        %v628 = vmul.f32 %v548, %v624
        %629 = vrot.lane.b32.xlu0 %v547, 127
        %v630 = vpop.permute.xlu0 %629
        %631 = vrot.lane.b32.xlu0 %v548, 127
        %v632 = vpop.permute.xlu0 %631
        %vm633 = vcmp.lt.s32.totalorder %v304, 127
        %v634 = vsel %vm633, %v630, %v632
        %v635 = vsel %vm633, %v632, %v630
        %s636 = scalar_lea.vmem %s3, 8
        %v637 = vld [vmem:[%s636] sm:$0x3]
        %v639 = vlaneseq
        %v640 = vshrl.u32 %v639, 7
        %v641 = vsub.s32 0, %v640
        %v642 = vrot.slane %v637, %v641
        %v643 = vlaneseq
        %v644 = vshrl.u32 %v643, 7
        %v645 = vsub.s32 1, %v644
        %v646 = vrot.slane %v637, %v645
        %v649 = vmul.f32 %v634, %v642
        %v650 = vmul.f32 %v635, %v646
        %651 = vrot.lane.b32.xlu0 %v547, 126
        %v652 = vpop.permute.xlu0 %651
        %653 = vrot.lane.b32.xlu0 %v548, 126
        %v654 = vpop.permute.xlu0 %653
        %vm655 = vcmp.lt.s32.totalorder %v304, 126
        %v656 = vsel %vm655, %v652, %v654
        %v657 = vsel %vm655, %v654, %v652
        %s658 = scalar_lea.vmem %s3, 10
        %v659 = vld [vmem:[%s658] sm:$0x3]
        %v661 = vlaneseq
        %v662 = vshrl.u32 %v661, 7
        %v663 = vsub.s32 0, %v662
        %v664 = vrot.slane %v659, %v663
        %v665 = vlaneseq
        %v666 = vshrl.u32 %v665, 7
        %v667 = vsub.s32 1, %v666
        %v668 = vrot.slane %v659, %v667
        %v671 = vmul.f32 %v656, %v664
        %v672 = vmul.f32 %v657, %v668
        %673 = vrot.lane.b32.xlu0 %v547, 125
        %v674 = vpop.permute.xlu0 %673
        %675 = vrot.lane.b32.xlu0 %v548, 125
        %v676 = vpop.permute.xlu0 %675
        %vm677 = vcmp.lt.s32.totalorder %v304, 125
        %v678 = vsel %vm677, %v674, %v676
        %v679 = vsel %vm677, %v676, %v674
        %s680 = scalar_lea.vmem %s3, 12
        %v681 = vld [vmem:[%s680] sm:$0x3]
        %v683 = vlaneseq
        %v684 = vshrl.u32 %v683, 7
        %v685 = vsub.s32 0, %v684
        %v686 = vrot.slane %v681, %v685
        %v687 = vlaneseq
        %v688 = vshrl.u32 %v687, 7
        %v689 = vsub.s32 1, %v688
        %v690 = vrot.slane %v681, %v689
        %v693 = vmul.f32 %v678, %v686
        %v694 = vmul.f32 %v679, %v690
        %v697 = vrot.slane %v590, 6
        %v698 = vrot.slane %v591, 6
        %v703 = vrot.slane %v612, 4
        %v704 = vrot.slane %v613, 4
        %v709 = vrot.slane %v627, 2
        %v710 = vrot.slane %v628, 2
        %v715 = vrot.slane %v671, 6
        %v716 = vrot.slane %v672, 6
        %v721 = vrot.slane %v693, 4
        %v722 = vrot.slane %v694, 4
        %v725 = vsel %vm413, %v568, %v697
        %v726 = vsel %vm413, %v569, %v698
        %vm727 = vcmask 1043456
        %v728 = vsel %vm727, %v725, %v703
        %v729 = vsel %vm727, %v726, %v704
        %vm730 = vcmask 1045504
        %v731 = vsel %vm730, %v728, %v709
        %v732 = vsel %vm730, %v729, %v710
        %v733 = vsel %vm413, %v649, %v715
        %v734 = vsel %vm413, %v650, %v716
        %v735 = vsel %vm727, %v733, %v721
        %v736 = vsel %vm727, %v734, %v722
        %v737 = vld [vmem:[%s5] sm:$0x7f]
        %vm738 = vcmask 113664
        %v740 = vsel %vm738, %v737, 0
        %v743 = vsel %vm730, %v735, 0
        %v746 = vsel %vm730, %v736, 0
        %748 = vmatprep.subr.mxu0 %v732
        %749 = vmatpush1.msra.mxu0 %v731
        %750 = vmatprep.subr.mxu0 %v746
        %751 = vmatpush1.msra.mxu0 %v743
        %752 = vmatprep.subr.mxu0 0.0
        %753 = vmatpush1.msra.mxu0 0.0
        %754 = vmatprep.subr.mxu0 0.0
        %755 = vmatpush1.msra.mxu0 0.0
        %756 = vmatprep.subr.mxu0 0.0
        %757 = vmatpush1.msra.mxu0 0.0
        %758 = vmatprep.subr.mxu0 0.0
        %759 = vmatpush1.msra.mxu0 0.0
        %760 = vmatprep.subr.mxu0 0.0
        %761 = vmatpush1.msra.mxu0 0.0
        %762 = vmatprep.subr.mxu0 0.0
        %763 = vmatpush1.msra.mxu0 0.0
        %764 = vmatprep.subr.mxu0 0.0
        %765 = vmatpush1.msra.mxu0 0.0
        %766 = vmatprep.subr.mxu0 0.0
        %767 = vmatpush1.msra.mxu0 0.0
        %768 = vmatprep.subr.mxu0 0.0
        %769 = vmatpush1.msra.mxu0 0.0
        %770 = vmatprep.subr.mxu0 0.0
        %771 = vmatpush1.msra.mxu0 0.0
        %772 = vmatprep.subr.mxu0 0.0
        %773 = vmatpush1.msra.mxu0 0.0
        %774 = vmatprep.subr.mxu0 0.0
        %775 = vmatpush1.msra.mxu0 0.0
        %776 = vmatprep.subr.mxu0 0.0
        %777 = vmatpush1.msra.mxu0 0.0
        %778 = vmatprep.subr.mxu0 0.0
        %779 = vmatpush1.msra.mxu0 0.0
        %780 = vmatprep.subr.mxu0 0.0
        %781 = vmatpush1.msra.mxu0 0.0
        %782 = vmatprep.subr.mxu0 0.0
        %783 = vmatpush1.msra.mxu0 0.0
        %784 = vmatprep.subr.mxu0 0.0
        %785 = vmatpush1.msra.mxu0 0.0
        %786 = vmatprep.subr.mxu0 0.0
        %787 = vmatpush1.msra.mxu0 0.0
        %788 = vmatprep.subr.mxu0 0.0
        %789 = vmatpush1.msra.mxu0 0.0
        %790 = vmatprep.subr.mxu0 0.0
        %791 = vmatpush1.msra.mxu0 0.0
        %792 = vmatprep.subr.mxu0 0.0
        %793 = vmatpush1.msra.mxu0 0.0
        %794 = vmatprep.subr.mxu0 0.0
        %795 = vmatpush1.msra.mxu0 0.0
        %796 = vmatprep.subr.mxu0 0.0
        %797 = vmatpush1.msra.mxu0 0.0
        %798 = vmatprep.subr.mxu0 0.0
        %799 = vmatpush1.msra.mxu0 0.0
        %800 = vmatprep.subr.mxu0 0.0
        %801 = vmatpush1.msra.mxu0 0.0
        %802 = vmatprep.subr.mxu0 0.0
        %803 = vmatpush1.msra.mxu0 0.0
        %804 = vmatprep.subr.mxu0 0.0
        %805 = vmatpush1.msra.mxu0 0.0
        %806 = vmatprep.subr.mxu0 0.0
        %807 = vmatpush1.msra.mxu0 0.0
        %808 = vmatprep.subr.mxu0 0.0
        %809 = vmatpush1.msra.mxu0 0.0
        %810 = vmatprep.subr.mxu0 0.0
        %811 = vmatpush1.msra.mxu0 0.0
        %812 = vmatprep.mubr.f32.mxu0 0.0
        %813 = vmatmul.mubr.f32.gmra.mrb[0].mxu0 %v740
        %v814 = vpop.f32.mrb[0].mxu0
        %v815 = vadd.f32 0.0, %v814
        %v816 = vpop.f32.mrb[0].mxu0
        %v817 = vadd.f32 0.0, %v816
        %818 = vdwg.mxu0
        %v819 = vld [vmem:[%s4] sm:$0x3]
        %820 = vrot.lane.b32.xlu0 %v815, 48
        %v821 = vpop.permute.xlu0 %820
        %822 = vrot.lane.b32.xlu0 %v817, 48
        %v823 = vpop.permute.xlu0 %822
        %vm824 = vcmp.lt.s32.totalorder %v304, 48
        %v825 = vsel %vm824, %v821, %v823
        %v826 = vsel %vm824, %v823, %v821
        %v829 = vcombine.low %v826, %v825
        %v831 = vunpack.c.l.s4 1966171168
        %v832 = vunpack.c.0.s8 %v831
        %v833 = vlaneseq
        %v834 = vshrl.u32 %v833, 7
        %v835 = vsub.s32 %v832, %v834
        %v836 = vrot.slane %v829, %v835
        %v838 = vunpack.c.l.s4 1966171168
        %v839 = vunpack.c.0.s8 %v838
        %v840 = vlaneseq
        %v841 = vshrl.u32 %v840, 7
        %v842 = vsub.s32 %v839, %v841
        %v843 = vrot.slane %v836, %v842
        %v845 = vmul.f32 %v819, %v843
        %v846 = vadd.f32 %v845, 0.0
        %s847 = scalar_lea.vmem %s4, 2
        %v848 = vld [vmem:[%s847] sm:$0x3]
        %v851 = vrot.slane %v815, 1
        %v852 = vrot.slane %v817, 1
        %855 = vrot.lane.b32.xlu0 %v851, 32
        %v856 = vpop.permute.xlu0 %855
        %857 = vrot.lane.b32.xlu0 %v852, 32
        %v858 = vpop.permute.xlu0 %857
        %vm859 = vcmp.lt.s32.totalorder %v304, 32
        %v860 = vsel %vm859, %v856, %v858
        %v861 = vsel %vm859, %v858, %v856
        %v864 = vcombine.low %v861, %v860
        %v866 = vunpack.c.l.s4 1966171168
        %v867 = vunpack.c.0.s8 %v866
        %v868 = vlaneseq
        %v869 = vshrl.u32 %v868, 7
        %v870 = vsub.s32 %v867, %v869
        %v871 = vrot.slane %v864, %v870
        %v873 = vunpack.c.l.s4 1966171168
        %v874 = vunpack.c.0.s8 %v873
        %v875 = vlaneseq
        %v876 = vshrl.u32 %v875, 7
        %v877 = vsub.s32 %v874, %v876
        %v878 = vrot.slane %v871, %v877
        %v880 = vmul.f32 %v848, %v878
        %v881 = vadd.f32 %v846, %v880
        %s882 = scalar_lea.vmem %s4, 4
        %v883 = vld [vmem:[%s882] sm:$0x3]
        %v884 = vrot.slane %v815, 2
        %v885 = vrot.slane %v817, 2
        %888 = vrot.lane.b32.xlu0 %v884, 16
        %v889 = vpop.permute.xlu0 %888
        %890 = vrot.lane.b32.xlu0 %v885, 16
        %v891 = vpop.permute.xlu0 %890
        %vm892 = vcmp.lt.s32.totalorder %v304, 16
        %v893 = vsel %vm892, %v889, %v891
        %v894 = vsel %vm892, %v891, %v889
        %v897 = vcombine.low %v894, %v893
        %v899 = vunpack.c.l.s4 1966171168
        %v900 = vunpack.c.0.s8 %v899
        %v901 = vlaneseq
        %v902 = vshrl.u32 %v901, 7
        %v903 = vsub.s32 %v900, %v902
        %v904 = vrot.slane %v897, %v903
        %v906 = vunpack.c.l.s4 1966171168
        %v907 = vunpack.c.0.s8 %v906
        %v908 = vlaneseq
        %v909 = vshrl.u32 %v908, 7
        %v910 = vsub.s32 %v907, %v909
        %v911 = vrot.slane %v904, %v910
        %v913 = vmul.f32 %v883, %v911
        %v914 = vadd.f32 %v881, %v913
        %s915 = scalar_lea.vmem %s4, 6
        %v916 = vld [vmem:[%s915] sm:$0x3]
        %v917 = vcombine.low %v815, %v817
        %v919 = vunpack.c.l.s4 1966171168
        %v920 = vunpack.c.0.s8 %v919
        %v921 = vlaneseq
        %v922 = vshrl.u32 %v921, 7
        %v923 = vsub.s32 %v920, %v922
        %v924 = vrot.slane %v917, %v923
        %v925 = vcombine.high %v924, %v924
        %v927 = vunpack.c.l.s4 1966171168
        %v928 = vunpack.c.0.s8 %v927
        %v929 = vlaneseq
        %v930 = vshrl.u32 %v929, 7
        %v931 = vsub.s32 %v928, %v930
        %v932 = vrot.slane %v925, %v931
        %v933 = vcombine.high %v932, %v932
        %v935 = vmul.f32 %v916, %v933
        %v936 = vadd.f32 %v914, %v935
        %s937 = scalar_lea.vmem %s4, 8
        %v938 = vld [vmem:[%s937] sm:$0x3]
        %v939 = vrot.slane %v815, 4
        %v940 = vrot.slane %v817, 4
        %943 = vrot.lane.b32.xlu0 %v939, 112
        %v944 = vpop.permute.xlu0 %943
        %945 = vrot.lane.b32.xlu0 %v940, 112
        %v946 = vpop.permute.xlu0 %945
        %vm947 = vcmp.lt.s32.totalorder %v304, 112
        %v948 = vsel %vm947, %v944, %v946
        %v949 = vsel %vm947, %v946, %v944
        %v952 = vcombine.low %v948, %v949
        %v954 = vunpack.c.l.s4 1966171168
        %v955 = vunpack.c.0.s8 %v954
        %v956 = vlaneseq
        %v957 = vshrl.u32 %v956, 7
        %v958 = vsub.s32 %v955, %v957
        %v959 = vrot.slane %v952, %v958
        %v961 = vunpack.c.l.s4 1966171168
        %v962 = vunpack.c.0.s8 %v961
        %v963 = vlaneseq
        %v964 = vshrl.u32 %v963, 7
        %v965 = vsub.s32 %v962, %v964
        %v966 = vrot.slane %v959, %v965
        %v968 = vmul.f32 %v938, %v966
        %v969 = vadd.f32 %v936, %v968
        %s970 = scalar_lea.vmem %s4, 10
        %v971 = vld [vmem:[%s970] sm:$0x3]
        %v972 = vrot.slane %v815, 5
        %v973 = vrot.slane %v817, 5
        %976 = vrot.lane.b32.xlu0 %v972, 96
        %v977 = vpop.permute.xlu0 %976
        %978 = vrot.lane.b32.xlu0 %v973, 96
        %v979 = vpop.permute.xlu0 %978
        %vm980 = vcmp.lt.s32.totalorder %v304, 96
        %v981 = vsel %vm980, %v977, %v979
        %v982 = vsel %vm980, %v979, %v977
        %v985 = vcombine.low %v981, %v982
        %v987 = vunpack.c.l.s4 1966171168
        %v988 = vunpack.c.0.s8 %v987
        %v989 = vlaneseq
        %v990 = vshrl.u32 %v989, 7
        %v991 = vsub.s32 %v988, %v990
        %v992 = vrot.slane %v985, %v991
        %v994 = vunpack.c.l.s4 1966171168
        %v995 = vunpack.c.0.s8 %v994
        %v996 = vlaneseq
        %v997 = vshrl.u32 %v996, 7
        %v998 = vsub.s32 %v995, %v997
        %v999 = vrot.slane %v992, %v998
        %v1001 = vmul.f32 %v971, %v999
        %v1002 = vadd.f32 %v969, %v1001
        %s1003 = scalar_lea.vmem %s4, 12
        %v1004 = vld [vmem:[%s1003] sm:$0x3]
        %v1005 = vrot.slane %v815, 6
        %v1006 = vrot.slane %v817, 6
        %1009 = vrot.lane.b32.xlu0 %v1005, 80
        %v1010 = vpop.permute.xlu0 %1009
        %1011 = vrot.lane.b32.xlu0 %v1006, 80
        %v1012 = vpop.permute.xlu0 %1011
        %vm1013 = vcmp.lt.s32.totalorder %v304, 80
        %v1014 = vsel %vm1013, %v1010, %v1012
        %v1015 = vsel %vm1013, %v1012, %v1010
        %v1018 = vcombine.low %v1014, %v1015
        %v1020 = vunpack.c.l.s4 1966171168
        %v1021 = vunpack.c.0.s8 %v1020
        %v1022 = vlaneseq
        %v1023 = vshrl.u32 %v1022, 7
        %v1024 = vsub.s32 %v1021, %v1023
        %v1025 = vrot.slane %v1018, %v1024
        %v1027 = vunpack.c.l.s4 1966171168
        %v1028 = vunpack.c.0.s8 %v1027
        %v1029 = vlaneseq
        %v1030 = vshrl.u32 %v1029, 7
        %v1031 = vsub.s32 %v1028, %v1030
        %v1032 = vrot.slane %v1025, %v1031
        %v1034 = vmul.f32 %v1004, %v1032
        %v1035 = vadd.f32 %v1002, %v1034
        %v1036 = vsub.f32 0.0, %v1035
        %v1037 = vmul.f32 %v1036, 1.442695
        %v1038 = vpow.pop %v1037
        %v1039 = vadd.f32 %v1038, 1.0
        %v1040 = vrcp.pop %v1039
        %v1041 = vmul.f32 1.0, %v1040
        %v1042 = vld [vmem:[%s282] sm:$0xff]
        %v1043 = vld [vmem:[%s282 + $0x8] sm:$0xff]
        %v1044 = vld [vmem:[%s282 + $0x10] sm:$0xff]
        %v1045 = vld [vmem:[%s282 + $0x18] sm:$0xff]
        %v1047 = vlaneseq
        %v1048 = vshrl.u32 %v1047, 7
        %v1049 = vsub.s32 0, %v1048
        %v1050 = vrot.slane %v1041, %v1049
        %v1051 = vlaneseq
        %v1052 = vshrl.u32 %v1051, 7
        %v1053 = vsub.s32 1, %v1052
        %v1054 = vrot.slane %v1041, %v1053
        %v1057 = vmul.f32 %v1042, %v1050
        %v1058 = vmul.f32 %v1043, %v1054
        %v1059 = vmul.f32 %v1044, %v1050
        %v1060 = vmul.f32 %v1045, %v1054
        %1061 = vst [vmem:[%s282] sm:$0xff] %v1057
        %1062 = vst [vmem:[%s282 + $0x8] sm:$0xff] %v1058
        %1063 = vst [vmem:[%s282 + $0x10] sm:$0xff] %v1059
        %1064 = vst [vmem:[%s282 + $0x18] sm:$0xff] %v1060
        %s1065 = sand.u32 %s163, 1
        %s1066 = scalar_lea.sflag [#allocation4], %s1065
        %s1067 = sand.u32 %s163, 1
        %s1068 = smul.addr %s1067, 32
        %s1069 = scalar_lea.vmem [#allocation7], %s1068
        // Predicated region
        $region53: #{tpu_custom_call.1} parent=43 // pred_check
          %p1070 = pneg %p173
        $region54: #{tpu_custom_call.1} parent=43 // pred_check_branch
          %1072 = sbr.rel (%p1070) target = $region56
        $region55: #{tpu_custom_call.1} parent=43 // pred_region
          %s1074 = ssub.s32 512, 512
          %1075 = vsyncadd %s1066, %s1074
          %s1076 = smul.addr %s24, 4
          %s1077 = smul.addr %s1076, 128
          %s1078 = scalar_lea.hbm %s6, %s1077
          %s1079 = sshll.u32 %s1069, 4
          %s1080 = int_to_ptr.vmem [resolvable:$true] %s1079
          %1085 = dma.vmem_to_hbm [thread:$0]  %s1080, 512, %s1078, %s1066, 256, 256, 16
        $region56: #{tpu_custom_call.1} parent=43 // pred_fallthru
          _
      $region44: #{tpu_custom_call.1} parent=5 // pred_fallthru
        _
      %p1086 = scmp.le.s32.totalorder 2, %s19
      // Predicated region
      $region57: #{tpu_custom_call.1} parent=5 // pred_check
        %p1087 = pneg %p1086
      $region58: #{tpu_custom_call.1} parent=5 // pred_check_branch
        %1089 = sbr.rel (%p1087) target = $region60
      $region59: #{tpu_custom_call.1} parent=5 // pred_region
        %s1090 = ssub.s32 %s19, 2
        // Predicated region
        $region61: #{tpu_custom_call.1} parent=59 // pred_check
          %p1091 = pneg %p179
        $region62: #{tpu_custom_call.1} parent=59 // pred_check_branch
          %1093 = sbr.rel (%p1091) target = $region64
        $region63: #{tpu_custom_call.1} parent=59 // pred_region
          %s1094 = sand.u32 %s164, 1
          %s1095 = scalar_lea.sflag [#allocation4], %s1094
          %s1096 = sand.u32 %s164, 1
          %s1097 = smul.addr %s1096, 32
          %s1098 = scalar_lea.vmem [#allocation7], %s1097
          %1099 = dma.done %s1095, 512
        $region64: #{tpu_custom_call.1} parent=59 // pred_fallthru
          _
      $region60: #{tpu_custom_call.1} parent=5 // pred_fallthru
        _
    $region6: #{tpu_custom_call.1} parent=1 // loop_footer
      %s23 = sadd.s32 1, %s19
    $region7: #{tpu_custom_call.1} parent=1 // loop_footer_branch
      %18 = sbr.rel target = $region3
    $region8: #{tpu_custom_call.1} parent=1 // loop_exit
      _
    %1100 = vsyncpa [#allocation3], 1
    %s1101 = scalar_lea.sflag [#allocation3], 1
    %1102 = vsyncpa %s1101, 1
    %1103 = vsyncpa [#allocation6], 1
    %1104 = vsyncpa [#allocation4], 1
    %s1105 = scalar_lea.sflag [#allocation4], 1
    %1106 = vsyncpa %s1105, 1

</llo_original>
